<compile_context>
chip_gen: v7x
topology: tpu7x:2x2x1
jax: 0.10.0
libtpu: 0.0.40
codegen_flags: <defaults>
</compile_context>

<pallas_src>
import functools

import jax
import jax.numpy as jnp
from jax import lax
from jax.experimental import pallas as pl
from jax.experimental.pallas import tpu as pltpu


# ------------------------------ Pallas kernel -------------------------------

def _fused_conv_readout_kernel(pt_ref, cw_ref, cb_ref, rw_ref, rb_ref, out_ref):
    """One batch element per grid step.

    pt_ref : (1, KC, HW)    im2col patches, transposed (HW on lanes)
    cw_ref : (F, KC)        conv weight, flattened OIHW
    cb_ref : (F, 1)         conv bias
    rw_ref : (F, HW, NP)    readout weight, reordered + zero padded to NP lanes
    rb_ref : (1, NP)        readout bias, zero padded
    out_ref: (1, 1, NP)     padded output row
    """
    pt = pt_ref[0]                                               # [KC, HW]
    cw = cw_ref[...]                                             # [F, KC]

    # Conv-as-matmul on the MXU (f32 accumulate), bias + ReLU on the VPU.
    act = jnp.dot(cw, pt, preferred_element_type=jnp.float32)    # [F, HW]
    act = jnp.maximum(act + cb_ref[...], 0.0)                    # ReLU

    # Readout: out[n] = sum_f sum_p act[f, p] * rw[f, p, n]  (+ bias).
    # Unrolled over F (small) so no in-kernel reshape/transpose is needed.
    n_feat = act.shape[0]
    acc = jnp.zeros((1, out_ref.shape[-1]), jnp.float32)
    for f in range(n_feat):                                      # static unroll
        acc = acc + jnp.dot(act[f:f + 1, :], rw_ref[f],
                            preferred_element_type=jnp.float32)  # [1, NP]

    out_ref[0] = (acc + rb_ref[...]).astype(out_ref.dtype)


# ------------------------------- Glue (JAX) ---------------------------------

def _im2col_transposed(x, kh, kw, pad):
    """x: [B, C, H, W] -> [B, C*kh*kw, H*W], row order (C, kh, kw)."""
    B, C, H, W = x.shape
    xp = jnp.pad(x, ((0, 0), (0, 0), (pad, pad), (pad, pad)))
    cols = []
    for dy in range(kh):
        for dx in range(kw):
            cols.append(xp[:, :, dy:dy + H, dx:dx + W])          # [B, C, H, W]
    p = jnp.stack(cols, axis=0)                                  # [k*k,B,C,H,W]
    p = p.transpose(1, 2, 0, 3, 4)                               # [B,C,k*k,H,W]
    return p.reshape(B, C * kh * kw, H * W)


@jax.jit
def dnn_readout_combined_forward(x, params):
    """Forward pass matching the PyTorch module semantics (NCHW input)."""
    B, C, H, W = x.shape
    conv_w = params["conv_w"]          # [F, C, KH, KW]  (torch OIHW)
    conv_b = params["conv_b"]          # [F]
    ro_w = params["readout_w"]         # [N_out, F*H*W]  (torch Linear weight)
    ro_b = params["readout_b"]         # [N_out]

    F_out, _, KH, KW = conv_w.shape
    HW = H * W
    KC = C * KH * KW
    N_out = ro_w.shape[0]
    n_pad = max(128, ((N_out + 127) // 128) * 128)   # lane-dense output width

    # --- operand prep (tiny, one-time XLA work) ---
    patches_t = _im2col_transposed(x, KH, KW, pad=KH // 2)       # [B, KC, HW]
    cw_mat = conv_w.reshape(F_out, KC)                           # [F, KC]
    cb_2d = conv_b.reshape(F_out, 1)                             # [F, 1]
    # rw[f, p, n] = ro_w[n, f*HW + p]  -> kernel contracts without flatten.
    rw_r = ro_w.reshape(N_out, F_out, HW).transpose(1, 2, 0)     # [F, HW, N]
    rw_r = jnp.pad(rw_r, ((0, 0), (0, 0), (0, n_pad - N_out)))   # [F, HW, NP]
    rb_2d = jnp.pad(ro_b, (0, n_pad - N_out)).reshape(1, n_pad)  # [1, NP]

    flops = 2 * B * (F_out * KC * HW + F_out * HW * n_pad)
    bytes_accessed = 4 * (B * KC * HW + F_out * KC + F_out
                          + F_out * HW * n_pad + n_pad + B * n_pad)

    out_padded = pl.pallas_call(
        _fused_conv_readout_kernel,
        out_shape=jax.ShapeDtypeStruct((B, 1, n_pad), jnp.float32),
        grid=(B,),
        in_specs=[
            pl.BlockSpec((1, KC, HW), lambda b: (b, 0, 0)),       # patches_t
            pl.BlockSpec((F_out, KC), lambda b: (0, 0)),          # conv weight
            pl.BlockSpec((F_out, 1), lambda b: (0, 0)),           # conv bias
            pl.BlockSpec((F_out, HW, n_pad), lambda b: (0, 0, 0)),  # readout W
            pl.BlockSpec((1, n_pad), lambda b: (0, 0)),           # readout b
        ],
        out_specs=pl.BlockSpec((1, 1, n_pad), lambda b: (b, 0, 0)),
        compiler_params=pltpu.CompilerParams(
            dimension_semantics=("parallel",)),
        cost_estimate=pl.CostEstimate(
            flops=flops, transcendentals=0, bytes_accessed=bytes_accessed),
    )(patches_t, cw_mat, cb_2d, rw_r, rb_2d)

    return out_padded[:, 0, :N_out]                               # [B, N_out]


# -------------------------------- Reference ----------------------------------

def reference_forward(x, params):
    conv_w, conv_b = params["conv_w"], params["conv_b"]
    ro_w, ro_b = params["readout_w"], params["readout_b"]
    y = lax.conv_general_dilated(
        x, conv_w, window_strides=(1, 1), padding="SAME",
        dimension_numbers=("NCHW", "OIHW", "NCHW"))
    y = jnp.maximum(y + conv_b[None, :, None, None], 0.0)
    feat = y.reshape(x.shape[0], -1)
    return feat @ ro_w.T + ro_b


# ---------------------------------- Main --------------------------------------

if __name__ == "__main__":
    B, C, H, W = 2, 4, 16, 16
    F_out, KH, KW = 8, 3, 3
    N_out = 10

    key = jax.random.PRNGKey(0)
    kx, kw1, kb1, kw2, kb2 = jax.random.split(key, 5)

    x = jax.random.normal(kx, (B, C, H, W), dtype=jnp.float32)
    params = {
        "conv_w": 0.1 * jax.random.normal(kw1, (F_out, C, KH, KW), jnp.float32),
        "conv_b": 0.1 * jax.random.normal(kb1, (F_out,), jnp.float32),
        "readout_w": 0.05 * jax.random.normal(kw2, (N_out, F_out * H * W),
                                              jnp.float32),
        "readout_b": 0.05 * jax.random.normal(kb2, (N_out,), jnp.float32),
    }

    out = jax.block_until_ready(dnn_readout_combined_forward(x, params))
    ref = jax.block_until_ready(reference_forward(x, params))

    assert out.shape == (B, N_out), out.shape
    assert jnp.allclose(out, ref, rtol=1e-4, atol=1e-4), (
        float(jnp.max(jnp.abs(out - ref))))

    print("KERNEL_OK")
</pallas_src>

<mosaic_0001>
module attributes {stable_mosaic.version = 11 : i64} {
  func.func @_fused_conv_readout_kernel(%arg0: i32, %arg1: memref<1x36x256xf32, #tpu.memory_space<vmem>>, %arg2: memref<8x36xf32, #tpu.memory_space<vmem>>, %arg3: memref<8x1xf32, #tpu.memory_space<vmem>>, %arg4: memref<8x256x128xf32, #tpu.memory_space<vmem>>, %arg5: memref<1x128xf32, #tpu.memory_space<vmem>>, %arg6: memref<1x1x128xf32, #tpu.memory_space<vmem>>) attributes {dimension_semantics = [#tpu.dimension_semantics<parallel>], iteration_bounds = array<i64: 2>, scalar_prefetch = 0 : i64, scratch_operands = 0 : i64, tpu.core_type = #tpu.core_type<tc>, window_params = [{transform_indices = @transform_0, window_bounds = array<i64: 1, 36, 256>}, {pipeline_mode = #tpu.pipeline_mode<synchronous>, transform_indices = @transform_1, window_bounds = array<i64: 8, 36>}, {pipeline_mode = #tpu.pipeline_mode<synchronous>, transform_indices = @transform_2, window_bounds = array<i64: 8, 1>}, {pipeline_mode = #tpu.pipeline_mode<synchronous>, transform_indices = @transform_3, window_bounds = array<i64: 8, 256, 128>}, {pipeline_mode = #tpu.pipeline_mode<synchronous>, transform_indices = @transform_4, window_bounds = array<i64: 1, 128>}, {transform_indices = @transform_5, window_bounds = array<i64: 1, 1, 128>}]} {
    %c0 = arith.constant 0 : index
    %c0_0 = arith.constant 0 : index
    %c0_1 = arith.constant 0 : index
    %0 = vector.load %arg1[%c0, %c0_0, %c0_1] : memref<1x36x256xf32, #tpu.memory_space<vmem>>, vector<1x36x256xf32>
    %1 = vector.shape_cast %0 : vector<1x36x256xf32> to vector<36x256xf32>
    %c0_2 = arith.constant 0 : index
    %c0_3 = arith.constant 0 : index
    %2 = vector.load %arg2[%c0_2, %c0_3] : memref<8x36xf32, #tpu.memory_space<vmem>>, vector<8x36xf32>
    %cst = arith.constant dense<0.000000e+00> : vector<8x256xf32>
    %3 = tpu.matmul %2, %1, %cst {dimension_numbers = #tpu.dot_dimension_numbers<[1], [0], [0], [1], [0, 0, 1, 1], [], []>} : vector<8x36xf32>, vector<36x256xf32>, vector<8x256xf32> -> vector<8x256xf32>
    %c0_4 = arith.constant 0 : index
    %c0_5 = arith.constant 0 : index
    %4 = vector.load %arg3[%c0_4, %c0_5] : memref<8x1xf32, #tpu.memory_space<vmem>>, vector<8x1xf32>
    %5 = vector.broadcast %4 : vector<8x1xf32> to vector<8x256xf32>
    %6 = arith.addf %3, %5 : vector<8x256xf32>
    %cst_6 = arith.constant 0.000000e+00 : f32
    %7 = vector.broadcast %cst_6 : f32 to vector<8x256xf32>
    %8 = arith.maximumf %6, %7 : vector<8x256xf32>
    %cst_7 = arith.constant 0.000000e+00 : f32
    %9 = vector.broadcast %cst_7 : f32 to vector<1x128xf32>
    %10 = vector.extract_strided_slice %8 {offsets = [0, 0], sizes = [1, 256], strides = [1, 1]} : vector<8x256xf32> to vector<1x256xf32>
    %c0_8 = arith.constant 0 : index
    %c0_9 = arith.constant 0 : index
    %c0_10 = arith.constant 0 : index
    %11 = vector.load %arg4[%c0_8, %c0_9, %c0_10] : memref<8x256x128xf32, #tpu.memory_space<vmem>>, vector<1x256x128xf32>
    %12 = vector.shape_cast %11 : vector<1x256x128xf32> to vector<256x128xf32>
    %cst_11 = arith.constant dense<0.000000e+00> : vector<1x128xf32>
    %13 = tpu.matmul %10, %12, %cst_11 {dimension_numbers = #tpu.dot_dimension_numbers<[1], [0], [0], [1], [0, 0, 1, 1], [], []>} : vector<1x256xf32>, vector<256x128xf32>, vector<1x128xf32> -> vector<1x128xf32>
    %14 = arith.addf %9, %13 : vector<1x128xf32>
    %15 = vector.extract_strided_slice %8 {offsets = [1, 0], sizes = [1, 256], strides = [1, 1]} : vector<8x256xf32> to vector<1x256xf32>
    %c1 = arith.constant 1 : index
    %c0_12 = arith.constant 0 : index
    %c0_13 = arith.constant 0 : index
    %16 = vector.load %arg4[%c1, %c0_12, %c0_13] : memref<8x256x128xf32, #tpu.memory_space<vmem>>, vector<1x256x128xf32>
    %17 = vector.shape_cast %16 : vector<1x256x128xf32> to vector<256x128xf32>
    %cst_14 = arith.constant dense<0.000000e+00> : vector<1x128xf32>
    %18 = tpu.matmul %15, %17, %cst_14 {dimension_numbers = #tpu.dot_dimension_numbers<[1], [0], [0], [1], [0, 0, 1, 1], [], []>} : vector<1x256xf32>, vector<256x128xf32>, vector<1x128xf32> -> vector<1x128xf32>
    %19 = arith.addf %14, %18 : vector<1x128xf32>
    %20 = vector.extract_strided_slice %8 {offsets = [2, 0], sizes = [1, 256], strides = [1, 1]} : vector<8x256xf32> to vector<1x256xf32>
    %c2 = arith.constant 2 : index
    %c0_15 = arith.constant 0 : index
    %c0_16 = arith.constant 0 : index
    %21 = vector.load %arg4[%c2, %c0_15, %c0_16] : memref<8x256x128xf32, #tpu.memory_space<vmem>>, vector<1x256x128xf32>
    %22 = vector.shape_cast %21 : vector<1x256x128xf32> to vector<256x128xf32>
    %cst_17 = arith.constant dense<0.000000e+00> : vector<1x128xf32>
    %23 = tpu.matmul %20, %22, %cst_17 {dimension_numbers = #tpu.dot_dimension_numbers<[1], [0], [0], [1], [0, 0, 1, 1], [], []>} : vector<1x256xf32>, vector<256x128xf32>, vector<1x128xf32> -> vector<1x128xf32>
    %24 = arith.addf %19, %23 : vector<1x128xf32>
    %25 = vector.extract_strided_slice %8 {offsets = [3, 0], sizes = [1, 256], strides = [1, 1]} : vector<8x256xf32> to vector<1x256xf32>
    %c3 = arith.constant 3 : index
    %c0_18 = arith.constant 0 : index
    %c0_19 = arith.constant 0 : index
    %26 = vector.load %arg4[%c3, %c0_18, %c0_19] : memref<8x256x128xf32, #tpu.memory_space<vmem>>, vector<1x256x128xf32>
    %27 = vector.shape_cast %26 : vector<1x256x128xf32> to vector<256x128xf32>
    %cst_20 = arith.constant dense<0.000000e+00> : vector<1x128xf32>
    %28 = tpu.matmul %25, %27, %cst_20 {dimension_numbers = #tpu.dot_dimension_numbers<[1], [0], [0], [1], [0, 0, 1, 1], [], []>} : vector<1x256xf32>, vector<256x128xf32>, vector<1x128xf32> -> vector<1x128xf32>
    %29 = arith.addf %24, %28 : vector<1x128xf32>
    %30 = vector.extract_strided_slice %8 {offsets = [4, 0], sizes = [1, 256], strides = [1, 1]} : vector<8x256xf32> to vector<1x256xf32>
    %c4 = arith.constant 4 : index
    %c0_21 = arith.constant 0 : index
    %c0_22 = arith.constant 0 : index
    %31 = vector.load %arg4[%c4, %c0_21, %c0_22] : memref<8x256x128xf32, #tpu.memory_space<vmem>>, vector<1x256x128xf32>
    %32 = vector.shape_cast %31 : vector<1x256x128xf32> to vector<256x128xf32>
    %cst_23 = arith.constant dense<0.000000e+00> : vector<1x128xf32>
    %33 = tpu.matmul %30, %32, %cst_23 {dimension_numbers = #tpu.dot_dimension_numbers<[1], [0], [0], [1], [0, 0, 1, 1], [], []>} : vector<1x256xf32>, vector<256x128xf32>, vector<1x128xf32> -> vector<1x128xf32>
    %34 = arith.addf %29, %33 : vector<1x128xf32>
    %35 = vector.extract_strided_slice %8 {offsets = [5, 0], sizes = [1, 256], strides = [1, 1]} : vector<8x256xf32> to vector<1x256xf32>
    %c5 = arith.constant 5 : index
    %c0_24 = arith.constant 0 : index
    %c0_25 = arith.constant 0 : index
    %36 = vector.load %arg4[%c5, %c0_24, %c0_25] : memref<8x256x128xf32, #tpu.memory_space<vmem>>, vector<1x256x128xf32>
    %37 = vector.shape_cast %36 : vector<1x256x128xf32> to vector<256x128xf32>
    %cst_26 = arith.constant dense<0.000000e+00> : vector<1x128xf32>
    %38 = tpu.matmul %35, %37, %cst_26 {dimension_numbers = #tpu.dot_dimension_numbers<[1], [0], [0], [1], [0, 0, 1, 1], [], []>} : vector<1x256xf32>, vector<256x128xf32>, vector<1x128xf32> -> vector<1x128xf32>
    %39 = arith.addf %34, %38 : vector<1x128xf32>
    %40 = vector.extract_strided_slice %8 {offsets = [6, 0], sizes = [1, 256], strides = [1, 1]} : vector<8x256xf32> to vector<1x256xf32>
    %c6 = arith.constant 6 : index
    %c0_27 = arith.constant 0 : index
    %c0_28 = arith.constant 0 : index
    %41 = vector.load %arg4[%c6, %c0_27, %c0_28] : memref<8x256x128xf32, #tpu.memory_space<vmem>>, vector<1x256x128xf32>
    %42 = vector.shape_cast %41 : vector<1x256x128xf32> to vector<256x128xf32>
    %cst_29 = arith.constant dense<0.000000e+00> : vector<1x128xf32>
    %43 = tpu.matmul %40, %42, %cst_29 {dimension_numbers = #tpu.dot_dimension_numbers<[1], [0], [0], [1], [0, 0, 1, 1], [], []>} : vector<1x256xf32>, vector<256x128xf32>, vector<1x128xf32> -> vector<1x128xf32>
    %44 = arith.addf %39, %43 : vector<1x128xf32>
    %45 = vector.extract_strided_slice %8 {offsets = [7, 0], sizes = [1, 256], strides = [1, 1]} : vector<8x256xf32> to vector<1x256xf32>
    %c7 = arith.constant 7 : index
    %c0_30 = arith.constant 0 : index
    %c0_31 = arith.constant 0 : index
    %46 = vector.load %arg4[%c7, %c0_30, %c0_31] : memref<8x256x128xf32, #tpu.memory_space<vmem>>, vector<1x256x128xf32>
    %47 = vector.shape_cast %46 : vector<1x256x128xf32> to vector<256x128xf32>
    %cst_32 = arith.constant dense<0.000000e+00> : vector<1x128xf32>
    %48 = tpu.matmul %45, %47, %cst_32 {dimension_numbers = #tpu.dot_dimension_numbers<[1], [0], [0], [1], [0, 0, 1, 1], [], []>} : vector<1x256xf32>, vector<256x128xf32>, vector<1x128xf32> -> vector<1x128xf32>
    %49 = arith.addf %44, %48 : vector<1x128xf32>
    %c0_33 = arith.constant 0 : index
    %c0_34 = arith.constant 0 : index
    %50 = vector.load %arg5[%c0_33, %c0_34] : memref<1x128xf32, #tpu.memory_space<vmem>>, vector<1x128xf32>
    %51 = arith.addf %49, %50 : vector<1x128xf32>
    %c0_35 = arith.constant 0 : index
    %c0_36 = arith.constant 0 : index
    %c0_37 = arith.constant 0 : index
    %52 = vector.load %arg6[%c0_35, %c0_36, %c0_37] : memref<1x1x128xf32, #tpu.memory_space<vmem>>, vector<1x1x128xf32>
    %53 = vector.shape_cast %52 : vector<1x1x128xf32> to vector<1x128xf32>
    %54 = vector.shape_cast %51 : vector<1x128xf32> to vector<1x1x128xf32>
    tpu.vector_store %arg6[%c0_35, %c0_36, %c0_37], %54 {strides = array<i32>} : memref<1x1x128xf32, #tpu.memory_space<vmem>>, vector<1x1x128xf32>,
    return
  }
  func.func @transform_0(%arg0: i32) -> (i32, i32, i32) {
    %c0_i32 = arith.constant 0 : i32
    %c0_i32_0 = arith.constant 0 : i32
    %c0_i32_1 = arith.constant 0 : i32
    return %arg0, %c0_i32, %c0_i32_0 : i32, i32, i32
  }
  func.func @transform_1(%arg0: i32) -> (i32, i32) {
    %c0_i32 = arith.constant 0 : i32
    %c0_i32_0 = arith.constant 0 : i32
    %c0_i32_1 = arith.constant 0 : i32
    return %c0_i32, %c0_i32_0 : i32, i32
  }
  func.func @transform_2(%arg0: i32) -> (i32, i32) {
    %c0_i32 = arith.constant 0 : i32
    %c0_i32_0 = arith.constant 0 : i32
    %c0_i32_1 = arith.constant 0 : i32
    return %c0_i32, %c0_i32_0 : i32, i32
  }
  func.func @transform_3(%arg0: i32) -> (i32, i32, i32) {
    %c0_i32 = arith.constant 0 : i32
    %c0_i32_0 = arith.constant 0 : i32
    %c0_i32_1 = arith.constant 0 : i32
    %c0_i32_2 = arith.constant 0 : i32
    return %c0_i32, %c0_i32_0, %c0_i32_1 : i32, i32, i32
  }
  func.func @transform_4(%arg0: i32) -> (i32, i32) {
    %c0_i32 = arith.constant 0 : i32
    %c0_i32_0 = arith.constant 0 : i32
    %c0_i32_1 = arith.constant 0 : i32
    return %c0_i32, %c0_i32_0 : i32, i32
  }
  func.func @transform_5(%arg0: i32) -> (i32, i32, i32) {
    %c0_i32 = arith.constant 0 : i32
    %c0_i32_0 = arith.constant 0 : i32
    %c0_i32_1 = arith.constant 0 : i32
    return %arg0, %c0_i32, %c0_i32_0 : i32, i32, i32
  }
}

</mosaic_0001>

<llo_original>
// kernel: dnn_readout_combined_forward.1
$region0: #{dnn_readout_combined_forward.1}
  #allocation0 [shape = 'u32[]', space=smem, size = 0x4, offset = 0x4, fixed_abs, tag = 'smem constant byte address 0x4 - core index']
  #allocation1 [shape = 'u32[144,128]{1,0:T(1,128)}', space=vmem, size = 0x12000, scoped, tag = 'internal scratch']
  %s0 = inlined_call_operand.vmem [shape: f32[2,36,256], index: 0, kind: input, shape index: {}]
  %s1 = inlined_call_operand.vmem [shape: f32[8,36], index: 1, kind: input, shape index: {}]
  %s2 = inlined_call_operand.vmem [shape: f32[8,1], index: 2, kind: input, shape index: {}]
  %s3 = inlined_call_operand.vmem [shape: f32[8,256,128], index: 3, kind: input, shape index: {}]
  %s4 = inlined_call_operand.vmem [shape: f32[1,128], index: 4, kind: input, shape index: {}]
  %s5 = inlined_call_operand.hbm [shape: f32[2,1,128], index: 5, kind: output, shape index: {}]
  %s6 = sld [smem:[#allocation0]]
  $region53: #{dnn_readout_combined_forward.1} parent=0
    _
  %s8 = ssub.s32 1, %s6
  %s9 = scalar_select 0, %s8, %s6
  $region1: #{dnn_readout_combined_forward.1} parent=0
    #allocation2 [shape = 'u8[1024]{0}', space=vmem, size = 0x400, scoped, tag = 'output window, operand 0']
    #allocation3 [shape = 's32[2]{0}', space=sflag, size = 0x8, scoped, tag = 'scoped memory for dnn_readout_combined_forward.1']
    %10 = vsyncpa [#allocation3], 0
    %s11 = scalar_lea.sflag [#allocation3], 1
    %12 = vsyncpa %s11, 0
    loop: start=0, step=1, limit=4
    $region2: #{dnn_readout_combined_forward.1} parent=1 // loop_pre_header
      _
    $region3: #{dnn_readout_combined_forward.1} parent=1 // loop_header
      %s14 = sphi 0, %s18
      %p15 = scmp.ge.s32.totalorder %s14, 4
      %s24 = sphi 0, %s26
      %s27 = sphi 0, %s24
      %s28 = sphi 0, %s27
      %s44 = sphi 0, %s28
      %s48 = sphi 0, %s48
      %s50 = sphi 0, %s48
      %s51 = sphi 0, %s50
      %s65 = sphi 0, %s51
      %s69 = sphi 0, %s69
      %s71 = sphi 0, %s69
      %s72 = sphi 0, %s71
      %s86 = sphi 0, %s72
      %s90 = sphi 0, %s90
      %s92 = sphi 0, %s90
      %s93 = sphi 0, %s92
      %s107 = sphi 0, %s93
      %s111 = sphi 0, %s111
      %s113 = sphi 0, %s111
      %s114 = sphi 0, %s113
      %s128 = sphi 0, %s114
      %s134 = sphi 0, %s136
      %s137 = sphi 0, %s134
      %s138 = sphi 0, %s137
      %s154 = sphi 0, %s138
    $region4: #{dnn_readout_combined_forward.1} parent=1 // loop_header_branch
      %17 = sbr.rel (%p15) target = $region8
    $region5: #{dnn_readout_combined_forward.1} parent=1 // loop_body
      %s19 = ssub.s32 %s14, 1
      %s20 = ssub.s32 %s14, 2
      %s21 = sadd.s32 %s14, 1
      %s22 = ssub.s32 %s14, %s21
      %p23 = scmp.eq.s32.totalorder %s22, 0
      %s25 = sadd.s32 %s24, 1
      %s26 = scalar_select %p23, %s24, %s25
      %p29 = pneg %p23
      %p30 = scmp.eq.s32.totalorder %s14, 1
      %p31 = por %p29, %p30
      %p32 = scmp.ne.s32.totalorder %s24, %s27
      %p33 = scmp.eq.s32.totalorder %s14, 0
      %p34 = por %p32, %p33
      %p35 = scmp.ne.s32.totalorder %s24, %s27
      %p36 = scmp.eq.s32.totalorder %s19, 1
      %p37 = por %p35, %p36
      %p38 = scmp.ne.s32.totalorder %s27, %s28
      %p39 = scmp.eq.s32.totalorder %s19, 0
      %p40 = por %p38, %p39
      %p41 = scmp.ne.s32.totalorder %s27, %s28
      %p42 = scmp.eq.s32.totalorder %s20, 1
      %p43 = por %p41, %p42
      %p45 = scmp.ne.s32.totalorder %s28, %s44
      %p46 = scmp.eq.s32.totalorder %s20, 0
      %p47 = por %p45, %p46
      %s49 = sadd.s32 %s48, 1
      %p52 = scmp.eq.s32.totalorder %s14, 1
      %p53 = scmp.ne.s32.totalorder %s48, %s50
      %p54 = scmp.eq.s32.totalorder %s14, 0
      %p55 = por %p53, %p54
      %p56 = scmp.ne.s32.totalorder %s48, %s50
      %p57 = scmp.eq.s32.totalorder %s19, 1
      %p58 = por %p56, %p57
      %p59 = scmp.ne.s32.totalorder %s50, %s51
      %p60 = scmp.eq.s32.totalorder %s19, 0
      %p61 = por %p59, %p60
      %p62 = scmp.ne.s32.totalorder %s50, %s51
      %p63 = scmp.eq.s32.totalorder %s20, 1
      %p64 = por %p62, %p63
      %p66 = scmp.ne.s32.totalorder %s51, %s65
      %p67 = scmp.eq.s32.totalorder %s20, 0
      %p68 = por %p66, %p67
      %s70 = sadd.s32 %s69, 1
      %p73 = scmp.eq.s32.totalorder %s14, 1
      %p74 = scmp.ne.s32.totalorder %s69, %s71
      %p75 = scmp.eq.s32.totalorder %s14, 0
      %p76 = por %p74, %p75
      %p77 = scmp.ne.s32.totalorder %s69, %s71
      %p78 = scmp.eq.s32.totalorder %s19, 1
      %p79 = por %p77, %p78
      %p80 = scmp.ne.s32.totalorder %s71, %s72
      %p81 = scmp.eq.s32.totalorder %s19, 0
      %p82 = por %p80, %p81
      %p83 = scmp.ne.s32.totalorder %s71, %s72
      %p84 = scmp.eq.s32.totalorder %s20, 1
      %p85 = por %p83, %p84
      %p87 = scmp.ne.s32.totalorder %s72, %s86
      %p88 = scmp.eq.s32.totalorder %s20, 0
      %p89 = por %p87, %p88
      %s91 = sadd.s32 %s90, 1
      %p94 = scmp.eq.s32.totalorder %s14, 1
      %p95 = scmp.ne.s32.totalorder %s90, %s92
      %p96 = scmp.eq.s32.totalorder %s14, 0
      %p97 = por %p95, %p96
      %p98 = scmp.ne.s32.totalorder %s90, %s92
      %p99 = scmp.eq.s32.totalorder %s19, 1
      %p100 = por %p98, %p99
      %p101 = scmp.ne.s32.totalorder %s92, %s93
      %p102 = scmp.eq.s32.totalorder %s19, 0
      %p103 = por %p101, %p102
      %p104 = scmp.ne.s32.totalorder %s92, %s93
      %p105 = scmp.eq.s32.totalorder %s20, 1
      %p106 = por %p104, %p105
      %p108 = scmp.ne.s32.totalorder %s93, %s107
      %p109 = scmp.eq.s32.totalorder %s20, 0
      %p110 = por %p108, %p109
      %s112 = sadd.s32 %s111, 1
      %p115 = scmp.eq.s32.totalorder %s14, 1
      %p116 = scmp.ne.s32.totalorder %s111, %s113
      %p117 = scmp.eq.s32.totalorder %s14, 0
      %p118 = por %p116, %p117
      %p119 = scmp.ne.s32.totalorder %s111, %s113
      %p120 = scmp.eq.s32.totalorder %s19, 1
      %p121 = por %p119, %p120
      %p122 = scmp.ne.s32.totalorder %s113, %s114
      %p123 = scmp.eq.s32.totalorder %s19, 0
      %p124 = por %p122, %p123
      %p125 = scmp.ne.s32.totalorder %s113, %s114
      %p126 = scmp.eq.s32.totalorder %s20, 1
      %p127 = por %p125, %p126
      %p129 = scmp.ne.s32.totalorder %s114, %s128
      %p130 = scmp.eq.s32.totalorder %s20, 0
      %p131 = por %p129, %p130
      %s132 = ssub.s32 %s14, %s21
      %p133 = scmp.eq.s32.totalorder %s132, 0
      %s135 = sadd.s32 %s134, 1
      %s136 = scalar_select %p133, %s134, %s135
      %p139 = pneg %p133
      %p140 = scmp.eq.s32.totalorder %s14, 1
      %p141 = por %p139, %p140
      %p142 = scmp.ne.s32.totalorder %s134, %s137
      %p143 = scmp.eq.s32.totalorder %s14, 0
      %p144 = por %p142, %p143
      %p145 = scmp.ne.s32.totalorder %s134, %s137
      %p146 = scmp.eq.s32.totalorder %s19, 1
      %p147 = por %p145, %p146
      %p148 = scmp.ne.s32.totalorder %s137, %s138
      %p149 = scmp.eq.s32.totalorder %s19, 0
      %p150 = por %p148, %p149
      %p151 = scmp.ne.s32.totalorder %s137, %s138
      %p152 = scmp.eq.s32.totalorder %s20, 1
      %p153 = por %p151, %p152
      %p155 = scmp.ne.s32.totalorder %s138, %s154
      %p156 = scmp.eq.s32.totalorder %s20, 0
      %p157 = por %p155, %p156
      %p158 = scmp.le.s32.totalorder 1, %s14
      %p159 = scmp.lt.s32.totalorder %s14, 3
      %p160 = pnand %p158, %p159
      %p161 = pneg %p160
      // Predicated region
      $region9: #{dnn_readout_combined_forward.1} parent=5 // pred_check
        _
      $region10: #{dnn_readout_combined_forward.1} parent=5 // pred_check_branch
        %163 = sbr.rel (%p160) target = $region12
      $region11: #{dnn_readout_combined_forward.1} parent=5 // pred_region
        %s164 = ssub.s32 %s14, 1
        // Predicated region
        $region13: #{dnn_readout_combined_forward.1} parent=11 // pred_check
          %p165 = pneg %p61
        $region14: #{dnn_readout_combined_forward.1} parent=11 // pred_check_branch
          %167 = sbr.rel (%p165) target = $region16
        $region15: #{dnn_readout_combined_forward.1} parent=11 // pred_region
          _
        $region16: #{dnn_readout_combined_forward.1} parent=11 // pred_fallthru
          _
        // Predicated region
        $region17: #{dnn_readout_combined_forward.1} parent=11 // pred_check
          %p168 = pneg %p82
        $region18: #{dnn_readout_combined_forward.1} parent=11 // pred_check_branch
          %170 = sbr.rel (%p168) target = $region20
        $region19: #{dnn_readout_combined_forward.1} parent=11 // pred_region
          _
        $region20: #{dnn_readout_combined_forward.1} parent=11 // pred_fallthru
          _
        // Predicated region
        $region21: #{dnn_readout_combined_forward.1} parent=11 // pred_check
          %p171 = pneg %p103
        $region22: #{dnn_readout_combined_forward.1} parent=11 // pred_check_branch
          %173 = sbr.rel (%p171) target = $region24
        $region23: #{dnn_readout_combined_forward.1} parent=11 // pred_region
          _
        $region24: #{dnn_readout_combined_forward.1} parent=11 // pred_fallthru
          _
        // Predicated region
        $region25: #{dnn_readout_combined_forward.1} parent=11 // pred_check
          %p174 = pneg %p124
        $region26: #{dnn_readout_combined_forward.1} parent=11 // pred_check_branch
          %176 = sbr.rel (%p174) target = $region28
        $region27: #{dnn_readout_combined_forward.1} parent=11 // pred_region
          _
        $region28: #{dnn_readout_combined_forward.1} parent=11 // pred_fallthru
          _
      $region12: #{dnn_readout_combined_forward.1} parent=5 // pred_fallthru
        _
      %p177 = scmp.lt.s32.totalorder %s14, 2
      // Predicated region
      $region29: #{dnn_readout_combined_forward.1} parent=5 // pred_check
        %p178 = pneg %p177
      $region30: #{dnn_readout_combined_forward.1} parent=5 // pred_check_branch
        %180 = sbr.rel (%p178) target = $region32
      $region31: #{dnn_readout_combined_forward.1} parent=5 // pred_region
        // Predicated region
        $region33: #{dnn_readout_combined_forward.1} parent=31 // pred_check
          %p181 = pneg %p34
        $region34: #{dnn_readout_combined_forward.1} parent=31 // pred_check_branch
          %183 = sbr.rel (%p181) target = $region36
        $region35: #{dnn_readout_combined_forward.1} parent=31 // pred_region
          %p184 = scmp.lt.s32.totalorder %s14, 1
          %s185 = scalar_select %p184, %s14, 1
          %s186 = smul.addr %s185, 10
          %s187 = smul.addr %s186, 8
          %s188 = scalar_lea.vmem %s0, %s187
        $region36: #{dnn_readout_combined_forward.1} parent=31 // pred_fallthru
          _
      $region32: #{dnn_readout_combined_forward.1} parent=5 // pred_fallthru
        _
      %p189 = scmp.le.s32.totalorder 1, %s14
      %p190 = scmp.lt.s32.totalorder %s14, 3
      %p191 = pnand %p189, %p190
      %p192 = pneg %p191
      // Predicated region
      $region37: #{dnn_readout_combined_forward.1} parent=5 // pred_check
        _
      $region38: #{dnn_readout_combined_forward.1} parent=5 // pred_check_branch
        %194 = sbr.rel (%p191) target = $region40
      $region39: #{dnn_readout_combined_forward.1} parent=5 // pred_region
        %s195 = ssub.s32 %s14, 1
        %p196 = scmp.lt.s32.totalorder %s19, 1
        %s197 = scalar_select %p196, %s19, 1
        %s198 = smul.addr %s197, 10
        %s199 = smul.addr %s198, 8
        %s200 = scalar_lea.vmem %s0, %s199
        %p201 = pneg %p40
        %p202 = pneg %p37
        %p203 = pneg %p61
        %p204 = pneg %p58
        %p205 = pneg %p82
        %p206 = pneg %p79
        %p207 = pneg %p103
        %p208 = pneg %p100
        %p209 = pneg %p124
        %p210 = pneg %p121
        %p211 = pneg %p150
        %p212 = pneg %p147
        %s213 = sand.u32 %s137, 1
        %s214 = scalar_lea.sflag [#allocation3], %s213
        %s215 = sand.u32 %s137, 1
        %s216 = scalar_lea.vmem [#allocation2], %s215
        %p217 = scmp.lt.s32.totalorder %s19, 1
        %s218 = scalar_select %p217, %s19, 1
        %s219 = smul.addr %s218, 10
        %s220 = smul.addr %s219, 8
        %s221 = scalar_lea.vmem %s0, %s220
        %v222 = vld [vmem:[%s221] sm:$0xff]
        %v223 = vld [vmem:[%s221 + $0x8] sm:$0xff]
        %v224 = vld [vmem:[%s221 + $0x10] sm:$0xff]
        %v225 = vld [vmem:[%s221 + $0x18] sm:$0xff]
        %v226 = vld [vmem:[%s221 + $0x20] sm:$0xff]
        %v227 = vld [vmem:[%s221 + $0x28] sm:$0xff]
        %v228 = vld [vmem:[%s221 + $0x30] sm:$0xff]
        %v229 = vld [vmem:[%s221 + $0x38] sm:$0xff]
        %v230 = vld [vmem:[%s221 + $0x40] sm:$0xf]
        %v231 = vld [vmem:[%s221 + $0x48] sm:$0xf]
        %v232 = vld [vmem:[%s1] sm:$0xff]
        %v233 = vld [vmem:[%s2] sm:$0xff]
        %235 = vset.pattern.permute.xlu0 0
        %236 = vperm.xlu0 %235, %v233
        %v237 = vpop.permute.xlu0 %236
        %vm239 = vcmask 293888
        %v241 = vsel %vm239, %v232, 0
        %vm243 = vcmask 1043456
        %v245 = vsel %vm243, %v230, 0
        %v248 = vsel %vm243, %v231, 0
        %250 = vmatprep.subr.mxu0 %v223
        %251 = vmatpush1.msra.mxu0 %v222
        %252 = vmatprep.subr.mxu0 %v225
        %253 = vmatpush1.msra.mxu0 %v224
        %254 = vmatprep.subr.mxu0 %v227
        %255 = vmatpush1.msra.mxu0 %v226
        %256 = vmatprep.subr.mxu0 %v229
        %257 = vmatpush1.msra.mxu0 %v228
        %258 = vmatprep.subr.mxu0 %v248
        %259 = vmatpush1.msra.mxu0 %v245
        %260 = vmatprep.subr.mxu0 0.0
        %261 = vmatpush1.msra.mxu0 0.0
        %262 = vmatprep.subr.mxu0 0.0
        %263 = vmatpush1.msra.mxu0 0.0
        %264 = vmatprep.subr.mxu0 0.0
        %265 = vmatpush1.msra.mxu0 0.0
        %266 = vmatprep.subr.mxu0 0.0
        %267 = vmatpush1.msra.mxu0 0.0
        %268 = vmatprep.subr.mxu0 0.0
        %269 = vmatpush1.msra.mxu0 0.0
        %270 = vmatprep.subr.mxu0 0.0
        %271 = vmatpush1.msra.mxu0 0.0
        %272 = vmatprep.subr.mxu0 0.0
        %273 = vmatpush1.msra.mxu0 0.0
        %274 = vmatprep.subr.mxu0 0.0
        %275 = vmatpush1.msra.mxu0 0.0
        %276 = vmatprep.subr.mxu0 0.0
        %277 = vmatpush1.msra.mxu0 0.0
        %278 = vmatprep.subr.mxu0 0.0
        %279 = vmatpush1.msra.mxu0 0.0
        %280 = vmatprep.subr.mxu0 0.0
        %281 = vmatpush1.msra.mxu0 0.0
        %282 = vmatprep.subr.mxu0 0.0
        %283 = vmatpush1.msra.mxu0 0.0
        %284 = vmatprep.subr.mxu0 0.0
        %285 = vmatpush1.msra.mxu0 0.0
        %286 = vmatprep.subr.mxu0 0.0
        %287 = vmatpush1.msra.mxu0 0.0
        %288 = vmatprep.subr.mxu0 0.0
        %289 = vmatpush1.msra.mxu0 0.0
        %290 = vmatprep.subr.mxu0 0.0
        %291 = vmatpush1.msra.mxu0 0.0
        %292 = vmatprep.subr.mxu0 0.0
        %293 = vmatpush1.msra.mxu0 0.0
        %294 = vmatprep.subr.mxu0 0.0
        %295 = vmatpush1.msra.mxu0 0.0
        %296 = vmatprep.subr.mxu0 0.0
        %297 = vmatpush1.msra.mxu0 0.0
        %298 = vmatprep.subr.mxu0 0.0
        %299 = vmatpush1.msra.mxu0 0.0
        %300 = vmatprep.subr.mxu0 0.0
        %301 = vmatpush1.msra.mxu0 0.0
        %302 = vmatprep.subr.mxu0 0.0
        %303 = vmatpush1.msra.mxu0 0.0
        %304 = vmatprep.subr.mxu0 0.0
        %305 = vmatpush1.msra.mxu0 0.0
        %306 = vmatprep.subr.mxu0 0.0
        %307 = vmatpush1.msra.mxu0 0.0
        %308 = vmatprep.subr.mxu0 0.0
        %309 = vmatpush1.msra.mxu0 0.0
        %310 = vmatprep.subr.mxu0 0.0
        %311 = vmatpush1.msra.mxu0 0.0
        %312 = vmatprep.subr.mxu0 0.0
        %313 = vmatpush1.msra.mxu0 0.0
        %314 = vmatprep.mubr.f32.mxu0 0.0
        %315 = vmatmul.mubr.f32.gmra.mrb[0].mxu0 %v241
        %v316 = vpop.f32.mrb[0].mxu0
        %v317 = vadd.f32 %v237, %v316
        %v318 = vpop.f32.mrb[0].mxu0
        %v319 = vadd.f32 %v237, %v318
        %320 = vdwg.mxu0
        %v321 = vmax.f32 %v317, 0.0
        %v322 = vmax.f32 %v319, 0.0
        %v323 = vld [vmem:[%s3] sm:$0xff]
        %v324 = vld [vmem:[%s3 + $0x8] sm:$0xff]
        %v325 = vld [vmem:[%s3 + $0x10] sm:$0xff]
        %v326 = vld [vmem:[%s3 + $0x18] sm:$0xff]
        %v327 = vld [vmem:[%s3 + $0x20] sm:$0xff]
        %v328 = vld [vmem:[%s3 + $0x28] sm:$0xff]
        %v329 = vld [vmem:[%s3 + $0x30] sm:$0xff]
        %v330 = vld [vmem:[%s3 + $0x38] sm:$0xff]
        %v331 = vld [vmem:[%s3 + $0x40] sm:$0xff]
        %v332 = vld [vmem:[%s3 + $0x48] sm:$0xff]
        %v333 = vld [vmem:[%s3 + $0x50] sm:$0xff]
        %v334 = vld [vmem:[%s3 + $0x58] sm:$0xff]
        %v335 = vld [vmem:[%s3 + $0x60] sm:$0xff]
        %v336 = vld [vmem:[%s3 + $0x68] sm:$0xff]
        %v337 = vld [vmem:[%s3 + $0x70] sm:$0xff]
        %v338 = vld [vmem:[%s3 + $0x78] sm:$0xff]
        %v339 = vld [vmem:[%s3 + $0x80] sm:$0xff]
        %v340 = vld [vmem:[%s3 + $0x88] sm:$0xff]
        %v341 = vld [vmem:[%s3 + $0x90] sm:$0xff]
        %v342 = vld [vmem:[%s3 + $0x98] sm:$0xff]
        %v343 = vld [vmem:[%s3 + $0xa0] sm:$0xff]
        %v344 = vld [vmem:[%s3 + $0xa8] sm:$0xff]
        %v345 = vld [vmem:[%s3 + $0xb0] sm:$0xff]
        %v346 = vld [vmem:[%s3 + $0xb8] sm:$0xff]
        %v347 = vld [vmem:[%s3 + $0xc0] sm:$0xff]
        %v348 = vld [vmem:[%s3 + $0xc8] sm:$0xff]
        %v349 = vld [vmem:[%s3 + $0xd0] sm:$0xff]
        %v350 = vld [vmem:[%s3 + $0xd8] sm:$0xff]
        %v351 = vld [vmem:[%s3 + $0xe0] sm:$0xff]
        %v352 = vld [vmem:[%s3 + $0xe8] sm:$0xff]
        %v353 = vld [vmem:[%s3 + $0xf0] sm:$0xff]
        %v354 = vld [vmem:[%s3 + $0xf8] sm:$0xff]
        %s355 = scalar_lea.vmem %s3, 256
        %v356 = vld [vmem:[%s355] sm:$0xff]
        %v357 = vld [vmem:[%s355 + $0x8] sm:$0xff]
        %v358 = vld [vmem:[%s355 + $0x10] sm:$0xff]
        %v359 = vld [vmem:[%s355 + $0x18] sm:$0xff]
        %v360 = vld [vmem:[%s355 + $0x20] sm:$0xff]
        %v361 = vld [vmem:[%s355 + $0x28] sm:$0xff]
        %v362 = vld [vmem:[%s355 + $0x30] sm:$0xff]
        %v363 = vld [vmem:[%s355 + $0x38] sm:$0xff]
        %v364 = vld [vmem:[%s355 + $0x40] sm:$0xff]
        %v365 = vld [vmem:[%s355 + $0x48] sm:$0xff]
        %v366 = vld [vmem:[%s355 + $0x50] sm:$0xff]
        %v367 = vld [vmem:[%s355 + $0x58] sm:$0xff]
        %v368 = vld [vmem:[%s355 + $0x60] sm:$0xff]
        %v369 = vld [vmem:[%s355 + $0x68] sm:$0xff]
        %v370 = vld [vmem:[%s355 + $0x70] sm:$0xff]
        %v371 = vld [vmem:[%s355 + $0x78] sm:$0xff]
        %v372 = vld [vmem:[%s355 + $0x80] sm:$0xff]
        %v373 = vld [vmem:[%s355 + $0x88] sm:$0xff]
        %v374 = vld [vmem:[%s355 + $0x90] sm:$0xff]
        %v375 = vld [vmem:[%s355 + $0x98] sm:$0xff]
        %v376 = vld [vmem:[%s355 + $0xa0] sm:$0xff]
        %v377 = vld [vmem:[%s355 + $0xa8] sm:$0xff]
        %v378 = vld [vmem:[%s355 + $0xb0] sm:$0xff]
        %v379 = vld [vmem:[%s355 + $0xb8] sm:$0xff]
        %v380 = vld [vmem:[%s355 + $0xc0] sm:$0xff]
        %v381 = vld [vmem:[%s355 + $0xc8] sm:$0xff]
        %v382 = vld [vmem:[%s355 + $0xd0] sm:$0xff]
        %v383 = vld [vmem:[%s355 + $0xd8] sm:$0xff]
        %v384 = vld [vmem:[%s355 + $0xe0] sm:$0xff]
        %v385 = vld [vmem:[%s355 + $0xe8] sm:$0xff]
        %v386 = vld [vmem:[%s355 + $0xf0] sm:$0xff]
        %v387 = vld [vmem:[%s355 + $0xf8] sm:$0xff]
        %v390 = vrot.slane %v321, 1
        %v391 = vrot.slane %v322, 1
        %394 = vmatprep.subr.mxu0 0.0
        %395 = vmatpush1.msra.mxu0 %v356
        %396 = vmatprep.subr.mxu0 0.0
        %397 = vmatpush1.msra.mxu0 %v357
        %398 = vmatprep.subr.mxu0 0.0
        %399 = vmatpush1.msra.mxu0 %v358
        %400 = vmatprep.subr.mxu0 0.0
        %401 = vmatpush1.msra.mxu0 %v359
        %402 = vmatprep.subr.mxu0 0.0
        %403 = vmatpush1.msra.mxu0 %v360
        %404 = vmatprep.subr.mxu0 0.0
        %405 = vmatpush1.msra.mxu0 %v361
        %406 = vmatprep.subr.mxu0 0.0
        %407 = vmatpush1.msra.mxu0 %v362
        %408 = vmatprep.subr.mxu0 0.0
        %409 = vmatpush1.msra.mxu0 %v363
        %410 = vmatprep.subr.mxu0 0.0
        %411 = vmatpush1.msra.mxu0 %v364
        %412 = vmatprep.subr.mxu0 0.0
        %413 = vmatpush1.msra.mxu0 %v365
        %414 = vmatprep.subr.mxu0 0.0
        %415 = vmatpush1.msra.mxu0 %v366
        %416 = vmatprep.subr.mxu0 0.0
        %417 = vmatpush1.msra.mxu0 %v367
        %418 = vmatprep.subr.mxu0 0.0
        %419 = vmatpush1.msra.mxu0 %v368
        %420 = vmatprep.subr.mxu0 0.0
        %421 = vmatpush1.msra.mxu0 %v369
        %422 = vmatprep.subr.mxu0 0.0
        %423 = vmatpush1.msra.mxu0 %v370
        %424 = vmatprep.subr.mxu0 0.0
        %425 = vmatpush1.msra.mxu0 %v371
        %426 = vmatprep.subr.mxu0 0.0
        %427 = vmatpush1.msra.mxu0 %v372
        %428 = vmatprep.subr.mxu0 0.0
        %429 = vmatpush1.msra.mxu0 %v373
        %430 = vmatprep.subr.mxu0 0.0
        %431 = vmatpush1.msra.mxu0 %v374
        %432 = vmatprep.subr.mxu0 0.0
        %433 = vmatpush1.msra.mxu0 %v375
        %434 = vmatprep.subr.mxu0 0.0
        %435 = vmatpush1.msra.mxu0 %v376
        %436 = vmatprep.subr.mxu0 0.0
        %437 = vmatpush1.msra.mxu0 %v377
        %438 = vmatprep.subr.mxu0 0.0
        %439 = vmatpush1.msra.mxu0 %v378
        %440 = vmatprep.subr.mxu0 0.0
        %441 = vmatpush1.msra.mxu0 %v379
        %442 = vmatprep.subr.mxu0 0.0
        %443 = vmatpush1.msra.mxu0 %v380
        %444 = vmatprep.subr.mxu0 0.0
        %445 = vmatpush1.msra.mxu0 %v381
        %446 = vmatprep.subr.mxu0 0.0
        %447 = vmatpush1.msra.mxu0 %v382
        %448 = vmatprep.subr.mxu0 0.0
        %449 = vmatpush1.msra.mxu0 %v383
        %450 = vmatprep.subr.mxu0 0.0
        %451 = vmatpush1.msra.mxu0 %v384
        %452 = vmatprep.subr.mxu0 0.0
        %453 = vmatpush1.msra.mxu0 %v385
        %454 = vmatprep.subr.mxu0 0.0
        %455 = vmatpush1.msra.mxu0 %v386
        %456 = vmatprep.subr.mxu0 0.0
        %457 = vmatpush1.msra.mxu0 %v387
        %458 = vmatprep.mubr.f32.mxu0 %v391
        %459 = vmatmul.mubr.f32.gmra.mrb[0].mxu0 %v390
        %v460 = vpop.f32.mrb[0].mxu0
        %v461 = vadd.f32 0.0, %v460
        %v462 = vpop.f32.mrb[0].mxu0
        %463 = vdwg.mxu0
        %464 = vmatprep.subr.mxu0 0.0
        %465 = vmatpush1.msra.mxu0 %v323
        %466 = vmatprep.subr.mxu0 0.0
        %467 = vmatpush1.msra.mxu0 %v324
        %468 = vmatprep.subr.mxu0 0.0
        %469 = vmatpush1.msra.mxu0 %v325
        %470 = vmatprep.subr.mxu0 0.0
        %471 = vmatpush1.msra.mxu0 %v326
        %472 = vmatprep.subr.mxu0 0.0
        %473 = vmatpush1.msra.mxu0 %v327
        %474 = vmatprep.subr.mxu0 0.0
        %475 = vmatpush1.msra.mxu0 %v328
        %476 = vmatprep.subr.mxu0 0.0
        %477 = vmatpush1.msra.mxu0 %v329
        %478 = vmatprep.subr.mxu0 0.0
        %479 = vmatpush1.msra.mxu0 %v330
        %480 = vmatprep.subr.mxu0 0.0
        %481 = vmatpush1.msra.mxu0 %v331
        %482 = vmatprep.subr.mxu0 0.0
        %483 = vmatpush1.msra.mxu0 %v332
        %484 = vmatprep.subr.mxu0 0.0
        %485 = vmatpush1.msra.mxu0 %v333
        %486 = vmatprep.subr.mxu0 0.0
        %487 = vmatpush1.msra.mxu0 %v334
        %488 = vmatprep.subr.mxu0 0.0
        %489 = vmatpush1.msra.mxu0 %v335
        %490 = vmatprep.subr.mxu0 0.0
        %491 = vmatpush1.msra.mxu0 %v336
        %492 = vmatprep.subr.mxu0 0.0
        %493 = vmatpush1.msra.mxu0 %v337
        %494 = vmatprep.subr.mxu0 0.0
        %495 = vmatpush1.msra.mxu0 %v338
        %496 = vmatprep.subr.mxu0 0.0
        %497 = vmatpush1.msra.mxu0 %v339
        %498 = vmatprep.subr.mxu0 0.0
        %499 = vmatpush1.msra.mxu0 %v340
        %500 = vmatprep.subr.mxu0 0.0
        %501 = vmatpush1.msra.mxu0 %v341
        %502 = vmatprep.subr.mxu0 0.0
        %503 = vmatpush1.msra.mxu0 %v342
        %504 = vmatprep.subr.mxu0 0.0
        %505 = vmatpush1.msra.mxu0 %v343
        %506 = vmatprep.subr.mxu0 0.0
        %507 = vmatpush1.msra.mxu0 %v344
        %508 = vmatprep.subr.mxu0 0.0
        %509 = vmatpush1.msra.mxu0 %v345
        %510 = vmatprep.subr.mxu0 0.0
        %511 = vmatpush1.msra.mxu0 %v346
        %512 = vmatprep.subr.mxu0 0.0
        %513 = vmatpush1.msra.mxu0 %v347
        %514 = vmatprep.subr.mxu0 0.0
        %515 = vmatpush1.msra.mxu0 %v348
        %516 = vmatprep.subr.mxu0 0.0
        %517 = vmatpush1.msra.mxu0 %v349
        %518 = vmatprep.subr.mxu0 0.0
        %519 = vmatpush1.msra.mxu0 %v350
        %520 = vmatprep.subr.mxu0 0.0
        %521 = vmatpush1.msra.mxu0 %v351
        %522 = vmatprep.subr.mxu0 0.0
        %523 = vmatpush1.msra.mxu0 %v352
        %524 = vmatprep.subr.mxu0 0.0
        %525 = vmatpush1.msra.mxu0 %v353
        %526 = vmatprep.subr.mxu0 0.0
        %527 = vmatpush1.msra.mxu0 %v354
        %528 = vmatprep.mubr.f32.mxu0 %v322
        %529 = vmatmul.mubr.f32.gmra.mrb[0].mxu0 %v321
        %v530 = vpop.f32.mrb[0].mxu0
        %v531 = vadd.f32 %v461, %v530
        %v532 = vpop.f32.mrb[0].mxu0
        %533 = vdwg.mxu0
        %s534 = scalar_lea.vmem %s3, 512
        %v535 = vld [vmem:[%s534] sm:$0xff]
        %v536 = vld [vmem:[%s534 + $0x8] sm:$0xff]
        %v537 = vld [vmem:[%s534 + $0x10] sm:$0xff]
        %v538 = vld [vmem:[%s534 + $0x18] sm:$0xff]
        %v539 = vld [vmem:[%s534 + $0x20] sm:$0xff]
        %v540 = vld [vmem:[%s534 + $0x28] sm:$0xff]
        %v541 = vld [vmem:[%s534 + $0x30] sm:$0xff]
        %v542 = vld [vmem:[%s534 + $0x38] sm:$0xff]
        %v543 = vld [vmem:[%s534 + $0x40] sm:$0xff]
        %v544 = vld [vmem:[%s534 + $0x48] sm:$0xff]
        %v545 = vld [vmem:[%s534 + $0x50] sm:$0xff]
        %v546 = vld [vmem:[%s534 + $0x58] sm:$0xff]
        %v547 = vld [vmem:[%s534 + $0x60] sm:$0xff]
        %v548 = vld [vmem:[%s534 + $0x68] sm:$0xff]
        %v549 = vld [vmem:[%s534 + $0x70] sm:$0xff]
        %v550 = vld [vmem:[%s534 + $0x78] sm:$0xff]
        %v551 = vld [vmem:[%s534 + $0x80] sm:$0xff]
        %v552 = vld [vmem:[%s534 + $0x88] sm:$0xff]
        %v553 = vld [vmem:[%s534 + $0x90] sm:$0xff]
        %v554 = vld [vmem:[%s534 + $0x98] sm:$0xff]
        %v555 = vld [vmem:[%s534 + $0xa0] sm:$0xff]
        %v556 = vld [vmem:[%s534 + $0xa8] sm:$0xff]
        %v557 = vld [vmem:[%s534 + $0xb0] sm:$0xff]
        %v558 = vld [vmem:[%s534 + $0xb8] sm:$0xff]
        %v559 = vld [vmem:[%s534 + $0xc0] sm:$0xff]
        %v560 = vld [vmem:[%s534 + $0xc8] sm:$0xff]
        %v561 = vld [vmem:[%s534 + $0xd0] sm:$0xff]
        %v562 = vld [vmem:[%s534 + $0xd8] sm:$0xff]
        %v563 = vld [vmem:[%s534 + $0xe0] sm:$0xff]
        %v564 = vld [vmem:[%s534 + $0xe8] sm:$0xff]
        %v565 = vld [vmem:[%s534 + $0xf0] sm:$0xff]
        %v566 = vld [vmem:[%s534 + $0xf8] sm:$0xff]
        %v567 = vrot.slane %v321, 2
        %v568 = vrot.slane %v322, 2
        %571 = vmatprep.subr.mxu0 0.0
        %572 = vmatpush1.msra.mxu0 %v535
        %573 = vmatprep.subr.mxu0 0.0
        %574 = vmatpush1.msra.mxu0 %v536
        %575 = vmatprep.subr.mxu0 0.0
        %576 = vmatpush1.msra.mxu0 %v537
        %577 = vmatprep.subr.mxu0 0.0
        %578 = vmatpush1.msra.mxu0 %v538
        %579 = vmatprep.subr.mxu0 0.0
        %580 = vmatpush1.msra.mxu0 %v539
        %581 = vmatprep.subr.mxu0 0.0
        %582 = vmatpush1.msra.mxu0 %v540
        %583 = vmatprep.subr.mxu0 0.0
        %584 = vmatpush1.msra.mxu0 %v541
        %585 = vmatprep.subr.mxu0 0.0
        %586 = vmatpush1.msra.mxu0 %v542
        %587 = vmatprep.subr.mxu0 0.0
        %588 = vmatpush1.msra.mxu0 %v543
        %589 = vmatprep.subr.mxu0 0.0
        %590 = vmatpush1.msra.mxu0 %v544
        %591 = vmatprep.subr.mxu0 0.0
        %592 = vmatpush1.msra.mxu0 %v545
        %593 = vmatprep.subr.mxu0 0.0
        %594 = vmatpush1.msra.mxu0 %v546
        %595 = vmatprep.subr.mxu0 0.0
        %596 = vmatpush1.msra.mxu0 %v547
        %597 = vmatprep.subr.mxu0 0.0
        %598 = vmatpush1.msra.mxu0 %v548
        %599 = vmatprep.subr.mxu0 0.0
        %600 = vmatpush1.msra.mxu0 %v549
        %601 = vmatprep.subr.mxu0 0.0
        %602 = vmatpush1.msra.mxu0 %v550
        %603 = vmatprep.subr.mxu0 0.0
        %604 = vmatpush1.msra.mxu0 %v551
        %605 = vmatprep.subr.mxu0 0.0
        %606 = vmatpush1.msra.mxu0 %v552
        %607 = vmatprep.subr.mxu0 0.0
        %608 = vmatpush1.msra.mxu0 %v553
        %609 = vmatprep.subr.mxu0 0.0
        %610 = vmatpush1.msra.mxu0 %v554
        %611 = vmatprep.subr.mxu0 0.0
        %612 = vmatpush1.msra.mxu0 %v555
        %613 = vmatprep.subr.mxu0 0.0
        %614 = vmatpush1.msra.mxu0 %v556
        %615 = vmatprep.subr.mxu0 0.0
        %616 = vmatpush1.msra.mxu0 %v557
        %617 = vmatprep.subr.mxu0 0.0
        %618 = vmatpush1.msra.mxu0 %v558
        %619 = vmatprep.subr.mxu0 0.0
        %620 = vmatpush1.msra.mxu0 %v559
        %621 = vmatprep.subr.mxu0 0.0
        %622 = vmatpush1.msra.mxu0 %v560
        %623 = vmatprep.subr.mxu0 0.0
        %624 = vmatpush1.msra.mxu0 %v561
        %625 = vmatprep.subr.mxu0 0.0
        %626 = vmatpush1.msra.mxu0 %v562
        %627 = vmatprep.subr.mxu0 0.0
        %628 = vmatpush1.msra.mxu0 %v563
        %629 = vmatprep.subr.mxu0 0.0
        %630 = vmatpush1.msra.mxu0 %v564
        %631 = vmatprep.subr.mxu0 0.0
        %632 = vmatpush1.msra.mxu0 %v565
        %633 = vmatprep.subr.mxu0 0.0
        %634 = vmatpush1.msra.mxu0 %v566
        %635 = vmatprep.mubr.f32.mxu0 %v568
        %636 = vmatmul.mubr.f32.gmra.mrb[0].mxu0 %v567
        %v637 = vpop.f32.mrb[0].mxu0
        %v638 = vadd.f32 0.0, %v637
        %v639 = vpop.f32.mrb[0].mxu0
        %640 = vdwg.mxu0
        %v641 = vadd.f32 %v531, %v638
        %s642 = scalar_lea.vmem %s3, 768
        %v643 = vld [vmem:[%s642] sm:$0xff]
        %v644 = vld [vmem:[%s642 + $0x8] sm:$0xff]
        %v645 = vld [vmem:[%s642 + $0x10] sm:$0xff]
        %v646 = vld [vmem:[%s642 + $0x18] sm:$0xff]
        %v647 = vld [vmem:[%s642 + $0x20] sm:$0xff]
        %v648 = vld [vmem:[%s642 + $0x28] sm:$0xff]
        %v649 = vld [vmem:[%s642 + $0x30] sm:$0xff]
        %v650 = vld [vmem:[%s642 + $0x38] sm:$0xff]
        %v651 = vld [vmem:[%s642 + $0x40] sm:$0xff]
        %v652 = vld [vmem:[%s642 + $0x48] sm:$0xff]
        %v653 = vld [vmem:[%s642 + $0x50] sm:$0xff]
        %v654 = vld [vmem:[%s642 + $0x58] sm:$0xff]
        %v655 = vld [vmem:[%s642 + $0x60] sm:$0xff]
        %v656 = vld [vmem:[%s642 + $0x68] sm:$0xff]
        %v657 = vld [vmem:[%s642 + $0x70] sm:$0xff]
        %v658 = vld [vmem:[%s642 + $0x78] sm:$0xff]
        %v659 = vld [vmem:[%s642 + $0x80] sm:$0xff]
        %v660 = vld [vmem:[%s642 + $0x88] sm:$0xff]
        %v661 = vld [vmem:[%s642 + $0x90] sm:$0xff]
        %v662 = vld [vmem:[%s642 + $0x98] sm:$0xff]
        %v663 = vld [vmem:[%s642 + $0xa0] sm:$0xff]
        %v664 = vld [vmem:[%s642 + $0xa8] sm:$0xff]
        %v665 = vld [vmem:[%s642 + $0xb0] sm:$0xff]
        %v666 = vld [vmem:[%s642 + $0xb8] sm:$0xff]
        %v667 = vld [vmem:[%s642 + $0xc0] sm:$0xff]
        %v668 = vld [vmem:[%s642 + $0xc8] sm:$0xff]
        %v669 = vld [vmem:[%s642 + $0xd0] sm:$0xff]
        %v670 = vld [vmem:[%s642 + $0xd8] sm:$0xff]
        %v671 = vld [vmem:[%s642 + $0xe0] sm:$0xff]
        %v672 = vld [vmem:[%s642 + $0xe8] sm:$0xff]
        %v673 = vld [vmem:[%s642 + $0xf0] sm:$0xff]
        %v674 = vld [vmem:[%s642 + $0xf8] sm:$0xff]
        %v675 = vrot.slane %v321, 3
        %v676 = vrot.slane %v322, 3
        %679 = vmatprep.subr.mxu0 0.0
        %680 = vmatpush1.msra.mxu0 %v643
        %681 = vmatprep.subr.mxu0 0.0
        %682 = vmatpush1.msra.mxu0 %v644
        %683 = vmatprep.subr.mxu0 0.0
        %684 = vmatpush1.msra.mxu0 %v645
        %685 = vmatprep.subr.mxu0 0.0
        %686 = vmatpush1.msra.mxu0 %v646
        %687 = vmatprep.subr.mxu0 0.0
        %688 = vmatpush1.msra.mxu0 %v647
        %689 = vmatprep.subr.mxu0 0.0
        %690 = vmatpush1.msra.mxu0 %v648
        %691 = vmatprep.subr.mxu0 0.0
        %692 = vmatpush1.msra.mxu0 %v649
        %693 = vmatprep.subr.mxu0 0.0
        %694 = vmatpush1.msra.mxu0 %v650
        %695 = vmatprep.subr.mxu0 0.0
        %696 = vmatpush1.msra.mxu0 %v651
        %697 = vmatprep.subr.mxu0 0.0
        %698 = vmatpush1.msra.mxu0 %v652
        %699 = vmatprep.subr.mxu0 0.0
        %700 = vmatpush1.msra.mxu0 %v653
        %701 = vmatprep.subr.mxu0 0.0
        %702 = vmatpush1.msra.mxu0 %v654
        %703 = vmatprep.subr.mxu0 0.0
        %704 = vmatpush1.msra.mxu0 %v655
        %705 = vmatprep.subr.mxu0 0.0
        %706 = vmatpush1.msra.mxu0 %v656
        %707 = vmatprep.subr.mxu0 0.0
        %708 = vmatpush1.msra.mxu0 %v657
        %709 = vmatprep.subr.mxu0 0.0
        %710 = vmatpush1.msra.mxu0 %v658
        %711 = vmatprep.subr.mxu0 0.0
        %712 = vmatpush1.msra.mxu0 %v659
        %713 = vmatprep.subr.mxu0 0.0
        %714 = vmatpush1.msra.mxu0 %v660
        %715 = vmatprep.subr.mxu0 0.0
        %716 = vmatpush1.msra.mxu0 %v661
        %717 = vmatprep.subr.mxu0 0.0
        %718 = vmatpush1.msra.mxu0 %v662
        %719 = vmatprep.subr.mxu0 0.0
        %720 = vmatpush1.msra.mxu0 %v663
        %721 = vmatprep.subr.mxu0 0.0
        %722 = vmatpush1.msra.mxu0 %v664
        %723 = vmatprep.subr.mxu0 0.0
        %724 = vmatpush1.msra.mxu0 %v665
        %725 = vmatprep.subr.mxu0 0.0
        %726 = vmatpush1.msra.mxu0 %v666
        %727 = vmatprep.subr.mxu0 0.0
        %728 = vmatpush1.msra.mxu0 %v667
        %729 = vmatprep.subr.mxu0 0.0
        %730 = vmatpush1.msra.mxu0 %v668
        %731 = vmatprep.subr.mxu0 0.0
        %732 = vmatpush1.msra.mxu0 %v669
        %733 = vmatprep.subr.mxu0 0.0
        %734 = vmatpush1.msra.mxu0 %v670
        %735 = vmatprep.subr.mxu0 0.0
        %736 = vmatpush1.msra.mxu0 %v671
        %737 = vmatprep.subr.mxu0 0.0
        %738 = vmatpush1.msra.mxu0 %v672
        %739 = vmatprep.subr.mxu0 0.0
        %740 = vmatpush1.msra.mxu0 %v673
        %741 = vmatprep.subr.mxu0 0.0
        %742 = vmatpush1.msra.mxu0 %v674
        %743 = vmatprep.mubr.f32.mxu0 %v676
        %744 = vmatmul.mubr.f32.gmra.mrb[0].mxu0 %v675
        %v745 = vpop.f32.mrb[0].mxu0
        %v746 = vadd.f32 0.0, %v745
        %v747 = vpop.f32.mrb[0].mxu0
        %748 = vdwg.mxu0
        %v749 = vadd.f32 %v641, %v746
        %s750 = scalar_lea.vmem %s3, 1024
        %v751 = vld [vmem:[%s750] sm:$0xff]
        %v752 = vld [vmem:[%s750 + $0x8] sm:$0xff]
        %v753 = vld [vmem:[%s750 + $0x10] sm:$0xff]
        %v754 = vld [vmem:[%s750 + $0x18] sm:$0xff]
        %v755 = vld [vmem:[%s750 + $0x20] sm:$0xff]
        %v756 = vld [vmem:[%s750 + $0x28] sm:$0xff]
        %v757 = vld [vmem:[%s750 + $0x30] sm:$0xff]
        %v758 = vld [vmem:[%s750 + $0x38] sm:$0xff]
        %v759 = vld [vmem:[%s750 + $0x40] sm:$0xff]
        %v760 = vld [vmem:[%s750 + $0x48] sm:$0xff]
        %v761 = vld [vmem:[%s750 + $0x50] sm:$0xff]
        %v762 = vld [vmem:[%s750 + $0x58] sm:$0xff]
        %v763 = vld [vmem:[%s750 + $0x60] sm:$0xff]
        %v764 = vld [vmem:[%s750 + $0x68] sm:$0xff]
        %v765 = vld [vmem:[%s750 + $0x70] sm:$0xff]
        %v766 = vld [vmem:[%s750 + $0x78] sm:$0xff]
        %v767 = vld [vmem:[%s750 + $0x80] sm:$0xff]
        %v768 = vld [vmem:[%s750 + $0x88] sm:$0xff]
        %v769 = vld [vmem:[%s750 + $0x90] sm:$0xff]
        %v770 = vld [vmem:[%s750 + $0x98] sm:$0xff]
        %v771 = vld [vmem:[%s750 + $0xa0] sm:$0xff]
        %v772 = vld [vmem:[%s750 + $0xa8] sm:$0xff]
        %v773 = vld [vmem:[%s750 + $0xb0] sm:$0xff]
        %v774 = vld [vmem:[%s750 + $0xb8] sm:$0xff]
        %v775 = vld [vmem:[%s750 + $0xc0] sm:$0xff]
        %v776 = vld [vmem:[%s750 + $0xc8] sm:$0xff]
        %v777 = vld [vmem:[%s750 + $0xd0] sm:$0xff]
        %v778 = vld [vmem:[%s750 + $0xd8] sm:$0xff]
        %v779 = vld [vmem:[%s750 + $0xe0] sm:$0xff]
        %v780 = vld [vmem:[%s750 + $0xe8] sm:$0xff]
        %v781 = vld [vmem:[%s750 + $0xf0] sm:$0xff]
        %v782 = vld [vmem:[%s750 + $0xf8] sm:$0xff]
        %v783 = vrot.slane %v321, 4
        %v784 = vrot.slane %v322, 4
        %787 = vmatprep.subr.mxu0 0.0
        %788 = vmatpush1.msra.mxu0 %v751
        %789 = vmatprep.subr.mxu0 0.0
        %790 = vmatpush1.msra.mxu0 %v752
        %791 = vmatprep.subr.mxu0 0.0
        %792 = vmatpush1.msra.mxu0 %v753
        %793 = vmatprep.subr.mxu0 0.0
        %794 = vmatpush1.msra.mxu0 %v754
        %795 = vmatprep.subr.mxu0 0.0
        %796 = vmatpush1.msra.mxu0 %v755
        %797 = vmatprep.subr.mxu0 0.0
        %798 = vmatpush1.msra.mxu0 %v756
        %799 = vmatprep.subr.mxu0 0.0
        %800 = vmatpush1.msra.mxu0 %v757
        %801 = vmatprep.subr.mxu0 0.0
        %802 = vmatpush1.msra.mxu0 %v758
        %803 = vmatprep.subr.mxu0 0.0
        %804 = vmatpush1.msra.mxu0 %v759
        %805 = vmatprep.subr.mxu0 0.0
        %806 = vmatpush1.msra.mxu0 %v760
        %807 = vmatprep.subr.mxu0 0.0
        %808 = vmatpush1.msra.mxu0 %v761
        %809 = vmatprep.subr.mxu0 0.0
        %810 = vmatpush1.msra.mxu0 %v762
        %811 = vmatprep.subr.mxu0 0.0
        %812 = vmatpush1.msra.mxu0 %v763
        %813 = vmatprep.subr.mxu0 0.0
        %814 = vmatpush1.msra.mxu0 %v764
        %815 = vmatprep.subr.mxu0 0.0
        %816 = vmatpush1.msra.mxu0 %v765
        %817 = vmatprep.subr.mxu0 0.0
        %818 = vmatpush1.msra.mxu0 %v766
        %819 = vmatprep.subr.mxu0 0.0
        %820 = vmatpush1.msra.mxu0 %v767
        %821 = vmatprep.subr.mxu0 0.0
        %822 = vmatpush1.msra.mxu0 %v768
        %823 = vmatprep.subr.mxu0 0.0
        %824 = vmatpush1.msra.mxu0 %v769
        %825 = vmatprep.subr.mxu0 0.0
        %826 = vmatpush1.msra.mxu0 %v770
        %827 = vmatprep.subr.mxu0 0.0
        %828 = vmatpush1.msra.mxu0 %v771
        %829 = vmatprep.subr.mxu0 0.0
        %830 = vmatpush1.msra.mxu0 %v772
        %831 = vmatprep.subr.mxu0 0.0
        %832 = vmatpush1.msra.mxu0 %v773
        %833 = vmatprep.subr.mxu0 0.0
        %834 = vmatpush1.msra.mxu0 %v774
        %835 = vmatprep.subr.mxu0 0.0
        %836 = vmatpush1.msra.mxu0 %v775
        %837 = vmatprep.subr.mxu0 0.0
        %838 = vmatpush1.msra.mxu0 %v776
        %839 = vmatprep.subr.mxu0 0.0
        %840 = vmatpush1.msra.mxu0 %v777
        %841 = vmatprep.subr.mxu0 0.0
        %842 = vmatpush1.msra.mxu0 %v778
        %843 = vmatprep.subr.mxu0 0.0
        %844 = vmatpush1.msra.mxu0 %v779
        %845 = vmatprep.subr.mxu0 0.0
        %846 = vmatpush1.msra.mxu0 %v780
        %847 = vmatprep.subr.mxu0 0.0
        %848 = vmatpush1.msra.mxu0 %v781
        %849 = vmatprep.subr.mxu0 0.0
        %850 = vmatpush1.msra.mxu0 %v782
        %851 = vmatprep.mubr.f32.mxu0 %v784
        %852 = vmatmul.mubr.f32.gmra.mrb[0].mxu0 %v783
        %v853 = vpop.f32.mrb[0].mxu0
        %v854 = vadd.f32 0.0, %v853
        %v855 = vpop.f32.mrb[0].mxu0
        %856 = vdwg.mxu0
        %v857 = vadd.f32 %v749, %v854
        %s858 = scalar_lea.vmem %s3, 1280
        %v859 = vld [vmem:[%s858] sm:$0xff]
        %v860 = vld [vmem:[%s858 + $0x8] sm:$0xff]
        %v861 = vld [vmem:[%s858 + $0x10] sm:$0xff]
        %v862 = vld [vmem:[%s858 + $0x18] sm:$0xff]
        %v863 = vld [vmem:[%s858 + $0x20] sm:$0xff]
        %v864 = vld [vmem:[%s858 + $0x28] sm:$0xff]
        %v865 = vld [vmem:[%s858 + $0x30] sm:$0xff]
        %v866 = vld [vmem:[%s858 + $0x38] sm:$0xff]
        %v867 = vld [vmem:[%s858 + $0x40] sm:$0xff]
        %v868 = vld [vmem:[%s858 + $0x48] sm:$0xff]
        %v869 = vld [vmem:[%s858 + $0x50] sm:$0xff]
        %v870 = vld [vmem:[%s858 + $0x58] sm:$0xff]
        %v871 = vld [vmem:[%s858 + $0x60] sm:$0xff]
        %v872 = vld [vmem:[%s858 + $0x68] sm:$0xff]
        %v873 = vld [vmem:[%s858 + $0x70] sm:$0xff]
        %v874 = vld [vmem:[%s858 + $0x78] sm:$0xff]
        %v875 = vld [vmem:[%s858 + $0x80] sm:$0xff]
        %v876 = vld [vmem:[%s858 + $0x88] sm:$0xff]
        %v877 = vld [vmem:[%s858 + $0x90] sm:$0xff]
        %v878 = vld [vmem:[%s858 + $0x98] sm:$0xff]
        %v879 = vld [vmem:[%s858 + $0xa0] sm:$0xff]
        %v880 = vld [vmem:[%s858 + $0xa8] sm:$0xff]
        %v881 = vld [vmem:[%s858 + $0xb0] sm:$0xff]
        %v882 = vld [vmem:[%s858 + $0xb8] sm:$0xff]
        %v883 = vld [vmem:[%s858 + $0xc0] sm:$0xff]
        %v884 = vld [vmem:[%s858 + $0xc8] sm:$0xff]
        %v885 = vld [vmem:[%s858 + $0xd0] sm:$0xff]
        %v886 = vld [vmem:[%s858 + $0xd8] sm:$0xff]
        %v887 = vld [vmem:[%s858 + $0xe0] sm:$0xff]
        %v888 = vld [vmem:[%s858 + $0xe8] sm:$0xff]
        %v889 = vld [vmem:[%s858 + $0xf0] sm:$0xff]
        %v890 = vld [vmem:[%s858 + $0xf8] sm:$0xff]
        %v891 = vrot.slane %v321, 5
        %v892 = vrot.slane %v322, 5
        %895 = vmatprep.subr.mxu0 0.0
        %896 = vmatpush1.msra.mxu0 %v859
        %897 = vmatprep.subr.mxu0 0.0
        %898 = vmatpush1.msra.mxu0 %v860
        %899 = vmatprep.subr.mxu0 0.0
        %900 = vmatpush1.msra.mxu0 %v861
        %901 = vmatprep.subr.mxu0 0.0
        %902 = vmatpush1.msra.mxu0 %v862
        %903 = vmatprep.subr.mxu0 0.0
        %904 = vmatpush1.msra.mxu0 %v863
        %905 = vmatprep.subr.mxu0 0.0
        %906 = vmatpush1.msra.mxu0 %v864
        %907 = vmatprep.subr.mxu0 0.0
        %908 = vmatpush1.msra.mxu0 %v865
        %909 = vmatprep.subr.mxu0 0.0
        %910 = vmatpush1.msra.mxu0 %v866
        %911 = vmatprep.subr.mxu0 0.0
        %912 = vmatpush1.msra.mxu0 %v867
        %913 = vmatprep.subr.mxu0 0.0
        %914 = vmatpush1.msra.mxu0 %v868
        %915 = vmatprep.subr.mxu0 0.0
        %916 = vmatpush1.msra.mxu0 %v869
        %917 = vmatprep.subr.mxu0 0.0
        %918 = vmatpush1.msra.mxu0 %v870
        %919 = vmatprep.subr.mxu0 0.0
        %920 = vmatpush1.msra.mxu0 %v871
        %921 = vmatprep.subr.mxu0 0.0
        %922 = vmatpush1.msra.mxu0 %v872
        %923 = vmatprep.subr.mxu0 0.0
        %924 = vmatpush1.msra.mxu0 %v873
        %925 = vmatprep.subr.mxu0 0.0
        %926 = vmatpush1.msra.mxu0 %v874
        %927 = vmatprep.subr.mxu0 0.0
        %928 = vmatpush1.msra.mxu0 %v875
        %929 = vmatprep.subr.mxu0 0.0
        %930 = vmatpush1.msra.mxu0 %v876
        %931 = vmatprep.subr.mxu0 0.0
        %932 = vmatpush1.msra.mxu0 %v877
        %933 = vmatprep.subr.mxu0 0.0
        %934 = vmatpush1.msra.mxu0 %v878
        %935 = vmatprep.subr.mxu0 0.0
        %936 = vmatpush1.msra.mxu0 %v879
        %937 = vmatprep.subr.mxu0 0.0
        %938 = vmatpush1.msra.mxu0 %v880
        %939 = vmatprep.subr.mxu0 0.0
        %940 = vmatpush1.msra.mxu0 %v881
        %941 = vmatprep.subr.mxu0 0.0
        %942 = vmatpush1.msra.mxu0 %v882
        %943 = vmatprep.subr.mxu0 0.0
        %944 = vmatpush1.msra.mxu0 %v883
        %945 = vmatprep.subr.mxu0 0.0
        %946 = vmatpush1.msra.mxu0 %v884
        %947 = vmatprep.subr.mxu0 0.0
        %948 = vmatpush1.msra.mxu0 %v885
        %949 = vmatprep.subr.mxu0 0.0
        %950 = vmatpush1.msra.mxu0 %v886
        %951 = vmatprep.subr.mxu0 0.0
        %952 = vmatpush1.msra.mxu0 %v887
        %953 = vmatprep.subr.mxu0 0.0
        %954 = vmatpush1.msra.mxu0 %v888
        %955 = vmatprep.subr.mxu0 0.0
        %956 = vmatpush1.msra.mxu0 %v889
        %957 = vmatprep.subr.mxu0 0.0
        %958 = vmatpush1.msra.mxu0 %v890
        %959 = vmatprep.mubr.f32.mxu0 %v892
        %960 = vmatmul.mubr.f32.gmra.mrb[0].mxu0 %v891
        %v961 = vpop.f32.mrb[0].mxu0
        %v962 = vadd.f32 0.0, %v961
        %v963 = vpop.f32.mrb[0].mxu0
        %964 = vdwg.mxu0
        %v965 = vadd.f32 %v857, %v962
        %s966 = scalar_lea.vmem %s3, 1536
        %v967 = vld [vmem:[%s966] sm:$0xff]
        %v968 = vld [vmem:[%s966 + $0x8] sm:$0xff]
        %v969 = vld [vmem:[%s966 + $0x10] sm:$0xff]
        %v970 = vld [vmem:[%s966 + $0x18] sm:$0xff]
        %v971 = vld [vmem:[%s966 + $0x20] sm:$0xff]
        %v972 = vld [vmem:[%s966 + $0x28] sm:$0xff]
        %v973 = vld [vmem:[%s966 + $0x30] sm:$0xff]
        %v974 = vld [vmem:[%s966 + $0x38] sm:$0xff]
        %v975 = vld [vmem:[%s966 + $0x40] sm:$0xff]
        %v976 = vld [vmem:[%s966 + $0x48] sm:$0xff]
        %v977 = vld [vmem:[%s966 + $0x50] sm:$0xff]
        %v978 = vld [vmem:[%s966 + $0x58] sm:$0xff]
        %v979 = vld [vmem:[%s966 + $0x60] sm:$0xff]
        %v980 = vld [vmem:[%s966 + $0x68] sm:$0xff]
        %v981 = vld [vmem:[%s966 + $0x70] sm:$0xff]
        %v982 = vld [vmem:[%s966 + $0x78] sm:$0xff]
        %v983 = vld [vmem:[%s966 + $0x80] sm:$0xff]
        %v984 = vld [vmem:[%s966 + $0x88] sm:$0xff]
        %v985 = vld [vmem:[%s966 + $0x90] sm:$0xff]
        %v986 = vld [vmem:[%s966 + $0x98] sm:$0xff]
        %v987 = vld [vmem:[%s966 + $0xa0] sm:$0xff]
        %v988 = vld [vmem:[%s966 + $0xa8] sm:$0xff]
        %v989 = vld [vmem:[%s966 + $0xb0] sm:$0xff]
        %v990 = vld [vmem:[%s966 + $0xb8] sm:$0xff]
        %v991 = vld [vmem:[%s966 + $0xc0] sm:$0xff]
        %v992 = vld [vmem:[%s966 + $0xc8] sm:$0xff]
        %v993 = vld [vmem:[%s966 + $0xd0] sm:$0xff]
        %v994 = vld [vmem:[%s966 + $0xd8] sm:$0xff]
        %v995 = vld [vmem:[%s966 + $0xe0] sm:$0xff]
        %v996 = vld [vmem:[%s966 + $0xe8] sm:$0xff]
        %v997 = vld [vmem:[%s966 + $0xf0] sm:$0xff]
        %v998 = vld [vmem:[%s966 + $0xf8] sm:$0xff]
        %v999 = vrot.slane %v321, 6
        %v1000 = vrot.slane %v322, 6
        %1003 = vmatprep.subr.mxu0 0.0
        %1004 = vmatpush1.msra.mxu0 %v967
        %1005 = vmatprep.subr.mxu0 0.0
        %1006 = vmatpush1.msra.mxu0 %v968
        %1007 = vmatprep.subr.mxu0 0.0
        %1008 = vmatpush1.msra.mxu0 %v969
        %1009 = vmatprep.subr.mxu0 0.0
        %1010 = vmatpush1.msra.mxu0 %v970
        %1011 = vmatprep.subr.mxu0 0.0
        %1012 = vmatpush1.msra.mxu0 %v971
        %1013 = vmatprep.subr.mxu0 0.0
        %1014 = vmatpush1.msra.mxu0 %v972
        %1015 = vmatprep.subr.mxu0 0.0
        %1016 = vmatpush1.msra.mxu0 %v973
        %1017 = vmatprep.subr.mxu0 0.0
        %1018 = vmatpush1.msra.mxu0 %v974
        %1019 = vmatprep.subr.mxu0 0.0
        %1020 = vmatpush1.msra.mxu0 %v975
        %1021 = vmatprep.subr.mxu0 0.0
        %1022 = vmatpush1.msra.mxu0 %v976
        %1023 = vmatprep.subr.mxu0 0.0
        %1024 = vmatpush1.msra.mxu0 %v977
        %1025 = vmatprep.subr.mxu0 0.0
        %1026 = vmatpush1.msra.mxu0 %v978
        %1027 = vmatprep.subr.mxu0 0.0
        %1028 = vmatpush1.msra.mxu0 %v979
        %1029 = vmatprep.subr.mxu0 0.0
        %1030 = vmatpush1.msra.mxu0 %v980
        %1031 = vmatprep.subr.mxu0 0.0
        %1032 = vmatpush1.msra.mxu0 %v981
        %1033 = vmatprep.subr.mxu0 0.0
        %1034 = vmatpush1.msra.mxu0 %v982
        %1035 = vmatprep.subr.mxu0 0.0
        %1036 = vmatpush1.msra.mxu0 %v983
        %1037 = vmatprep.subr.mxu0 0.0
        %1038 = vmatpush1.msra.mxu0 %v984
        %1039 = vmatprep.subr.mxu0 0.0
        %1040 = vmatpush1.msra.mxu0 %v985
        %1041 = vmatprep.subr.mxu0 0.0
        %1042 = vmatpush1.msra.mxu0 %v986
        %1043 = vmatprep.subr.mxu0 0.0
        %1044 = vmatpush1.msra.mxu0 %v987
        %1045 = vmatprep.subr.mxu0 0.0
        %1046 = vmatpush1.msra.mxu0 %v988
        %1047 = vmatprep.subr.mxu0 0.0
        %1048 = vmatpush1.msra.mxu0 %v989
        %1049 = vmatprep.subr.mxu0 0.0
        %1050 = vmatpush1.msra.mxu0 %v990
        %1051 = vmatprep.subr.mxu0 0.0
        %1052 = vmatpush1.msra.mxu0 %v991
        %1053 = vmatprep.subr.mxu0 0.0
        %1054 = vmatpush1.msra.mxu0 %v992
        %1055 = vmatprep.subr.mxu0 0.0
        %1056 = vmatpush1.msra.mxu0 %v993
        %1057 = vmatprep.subr.mxu0 0.0
        %1058 = vmatpush1.msra.mxu0 %v994
        %1059 = vmatprep.subr.mxu0 0.0
        %1060 = vmatpush1.msra.mxu0 %v995
        %1061 = vmatprep.subr.mxu0 0.0
        %1062 = vmatpush1.msra.mxu0 %v996
        %1063 = vmatprep.subr.mxu0 0.0
        %1064 = vmatpush1.msra.mxu0 %v997
        %1065 = vmatprep.subr.mxu0 0.0
        %1066 = vmatpush1.msra.mxu0 %v998
        %1067 = vmatprep.mubr.f32.mxu0 %v1000
        %1068 = vmatmul.mubr.f32.gmra.mrb[0].mxu0 %v999
        %v1069 = vpop.f32.mrb[0].mxu0
        %v1070 = vadd.f32 0.0, %v1069
        %v1071 = vpop.f32.mrb[0].mxu0
        %1072 = vdwg.mxu0
        %v1073 = vadd.f32 %v965, %v1070
        %s1074 = scalar_lea.vmem %s3, 1792
        %v1075 = vld [vmem:[%s1074] sm:$0xff]
        %v1076 = vld [vmem:[%s1074 + $0x8] sm:$0xff]
        %v1077 = vld [vmem:[%s1074 + $0x10] sm:$0xff]
        %v1078 = vld [vmem:[%s1074 + $0x18] sm:$0xff]
        %v1079 = vld [vmem:[%s1074 + $0x20] sm:$0xff]
        %v1080 = vld [vmem:[%s1074 + $0x28] sm:$0xff]
        %v1081 = vld [vmem:[%s1074 + $0x30] sm:$0xff]
        %v1082 = vld [vmem:[%s1074 + $0x38] sm:$0xff]
        %v1083 = vld [vmem:[%s1074 + $0x40] sm:$0xff]
        %v1084 = vld [vmem:[%s1074 + $0x48] sm:$0xff]
        %v1085 = vld [vmem:[%s1074 + $0x50] sm:$0xff]
        %v1086 = vld [vmem:[%s1074 + $0x58] sm:$0xff]
        %v1087 = vld [vmem:[%s1074 + $0x60] sm:$0xff]
        %v1088 = vld [vmem:[%s1074 + $0x68] sm:$0xff]
        %v1089 = vld [vmem:[%s1074 + $0x70] sm:$0xff]
        %v1090 = vld [vmem:[%s1074 + $0x78] sm:$0xff]
        %v1091 = vld [vmem:[%s1074 + $0x80] sm:$0xff]
        %v1092 = vld [vmem:[%s1074 + $0x88] sm:$0xff]
        %v1093 = vld [vmem:[%s1074 + $0x90] sm:$0xff]
        %v1094 = vld [vmem:[%s1074 + $0x98] sm:$0xff]
        %v1095 = vld [vmem:[%s1074 + $0xa0] sm:$0xff]
        %v1096 = vld [vmem:[%s1074 + $0xa8] sm:$0xff]
        %v1097 = vld [vmem:[%s1074 + $0xb0] sm:$0xff]
        %v1098 = vld [vmem:[%s1074 + $0xb8] sm:$0xff]
        %v1099 = vld [vmem:[%s1074 + $0xc0] sm:$0xff]
        %v1100 = vld [vmem:[%s1074 + $0xc8] sm:$0xff]
        %v1101 = vld [vmem:[%s1074 + $0xd0] sm:$0xff]
        %v1102 = vld [vmem:[%s1074 + $0xd8] sm:$0xff]
        %v1103 = vld [vmem:[%s1074 + $0xe0] sm:$0xff]
        %v1104 = vld [vmem:[%s1074 + $0xe8] sm:$0xff]
        %v1105 = vld [vmem:[%s1074 + $0xf0] sm:$0xff]
        %v1106 = vld [vmem:[%s1074 + $0xf8] sm:$0xff]
        %v1107 = vrot.slane %v321, 7
        %v1108 = vrot.slane %v322, 7
        %1111 = vmatprep.subr.mxu0 0.0
        %1112 = vmatpush1.msra.mxu0 %v1075
        %1113 = vmatprep.subr.mxu0 0.0
        %1114 = vmatpush1.msra.mxu0 %v1076
        %1115 = vmatprep.subr.mxu0 0.0
        %1116 = vmatpush1.msra.mxu0 %v1077
        %1117 = vmatprep.subr.mxu0 0.0
        %1118 = vmatpush1.msra.mxu0 %v1078
        %1119 = vmatprep.subr.mxu0 0.0
        %1120 = vmatpush1.msra.mxu0 %v1079
        %1121 = vmatprep.subr.mxu0 0.0
        %1122 = vmatpush1.msra.mxu0 %v1080
        %1123 = vmatprep.subr.mxu0 0.0
        %1124 = vmatpush1.msra.mxu0 %v1081
        %1125 = vmatprep.subr.mxu0 0.0
        %1126 = vmatpush1.msra.mxu0 %v1082
        %1127 = vmatprep.subr.mxu0 0.0
        %1128 = vmatpush1.msra.mxu0 %v1083
        %1129 = vmatprep.subr.mxu0 0.0
        %1130 = vmatpush1.msra.mxu0 %v1084
        %1131 = vmatprep.subr.mxu0 0.0
        %1132 = vmatpush1.msra.mxu0 %v1085
        %1133 = vmatprep.subr.mxu0 0.0
        %1134 = vmatpush1.msra.mxu0 %v1086
        %1135 = vmatprep.subr.mxu0 0.0
        %1136 = vmatpush1.msra.mxu0 %v1087
        %1137 = vmatprep.subr.mxu0 0.0
        %1138 = vmatpush1.msra.mxu0 %v1088
        %1139 = vmatprep.subr.mxu0 0.0
        %1140 = vmatpush1.msra.mxu0 %v1089
        %1141 = vmatprep.subr.mxu0 0.0
        %1142 = vmatpush1.msra.mxu0 %v1090
        %1143 = vmatprep.subr.mxu0 0.0
        %1144 = vmatpush1.msra.mxu0 %v1091
        %1145 = vmatprep.subr.mxu0 0.0
        %1146 = vmatpush1.msra.mxu0 %v1092
        %1147 = vmatprep.subr.mxu0 0.0
        %1148 = vmatpush1.msra.mxu0 %v1093
        %1149 = vmatprep.subr.mxu0 0.0
        %1150 = vmatpush1.msra.mxu0 %v1094
        %1151 = vmatprep.subr.mxu0 0.0
        %1152 = vmatpush1.msra.mxu0 %v1095
        %1153 = vmatprep.subr.mxu0 0.0
        %1154 = vmatpush1.msra.mxu0 %v1096
        %1155 = vmatprep.subr.mxu0 0.0
        %1156 = vmatpush1.msra.mxu0 %v1097
        %1157 = vmatprep.subr.mxu0 0.0
        %1158 = vmatpush1.msra.mxu0 %v1098
        %1159 = vmatprep.subr.mxu0 0.0
        %1160 = vmatpush1.msra.mxu0 %v1099
        %1161 = vmatprep.subr.mxu0 0.0
        %1162 = vmatpush1.msra.mxu0 %v1100
        %1163 = vmatprep.subr.mxu0 0.0
        %1164 = vmatpush1.msra.mxu0 %v1101
        %1165 = vmatprep.subr.mxu0 0.0
        %1166 = vmatpush1.msra.mxu0 %v1102
        %1167 = vmatprep.subr.mxu0 0.0
        %1168 = vmatpush1.msra.mxu0 %v1103
        %1169 = vmatprep.subr.mxu0 0.0
        %1170 = vmatpush1.msra.mxu0 %v1104
        %1171 = vmatprep.subr.mxu0 0.0
        %1172 = vmatpush1.msra.mxu0 %v1105
        %1173 = vmatprep.subr.mxu0 0.0
        %1174 = vmatpush1.msra.mxu0 %v1106
        %1175 = vmatprep.mubr.f32.mxu0 %v1108
        %1176 = vmatmul.mubr.f32.gmra.mrb[0].mxu0 %v1107
        %v1177 = vpop.f32.mrb[0].mxu0
        %v1178 = vadd.f32 0.0, %v1177
        %v1179 = vpop.f32.mrb[0].mxu0
        %1180 = vdwg.mxu0
        %v1181 = vadd.f32 %v1073, %v1178
        %v1182 = vld [vmem:[%s4] sm:$0x1]
        %v1183 = vadd.f32 %v1181, %v1182
        %1184 = vst [vmem:[%s216] sm:$0x1] %v1183
        %s1185 = sand.u32 %s137, 1
        %s1186 = scalar_lea.sflag [#allocation3], %s1185
        %s1187 = sand.u32 %s137, 1
        %s1188 = scalar_lea.vmem [#allocation2], %s1187
        // Predicated region
        $region41: #{dnn_readout_combined_forward.1} parent=39 // pred_check
          %p1189 = pneg %p147
        $region42: #{dnn_readout_combined_forward.1} parent=39 // pred_check_branch
          %1191 = sbr.rel (%p1189) target = $region44
        $region43: #{dnn_readout_combined_forward.1} parent=39 // pred_region
          %s1193 = ssub.s32 16, 16
          %1194 = vsyncadd %s1186, %s1193
          %s1195 = smul.addr %s19, 16
          %s1196 = scalar_lea.hbm %s5, %s1195
          %s1198 = sshll.u32 %s1188, 4
          %s1199 = int_to_ptr.vmem [resolvable:$true] %s1198
          %1201 = dma.vmem_to_hbm [thread:$0]  %s1199, 16, %s1196, %s1186
        $region44: #{dnn_readout_combined_forward.1} parent=39 // pred_fallthru
          _
      $region40: #{dnn_readout_combined_forward.1} parent=5 // pred_fallthru
        _
      %p1202 = scmp.le.s32.totalorder 2, %s14
      // Predicated region
      $region45: #{dnn_readout_combined_forward.1} parent=5 // pred_check
        %p1203 = pneg %p1202
      $region46: #{dnn_readout_combined_forward.1} parent=5 // pred_check_branch
        %1205 = sbr.rel (%p1203) target = $region48
      $region47: #{dnn_readout_combined_forward.1} parent=5 // pred_region
        %s1206 = ssub.s32 %s14, 2
        // Predicated region
        $region49: #{dnn_readout_combined_forward.1} parent=47 // pred_check
          %p1207 = pneg %p153
        $region50: #{dnn_readout_combined_forward.1} parent=47 // pred_check_branch
          %1209 = sbr.rel (%p1207) target = $region52
        $region51: #{dnn_readout_combined_forward.1} parent=47 // pred_region
          %s1210 = sand.u32 %s138, 1
          %s1211 = scalar_lea.sflag [#allocation3], %s1210
          %s1212 = sand.u32 %s138, 1
          %s1213 = scalar_lea.vmem [#allocation2], %s1212
          %1214 = dma.done %s1211, 16
        $region52: #{dnn_readout_combined_forward.1} parent=47 // pred_fallthru
          _
      $region48: #{dnn_readout_combined_forward.1} parent=5 // pred_fallthru
        _
    $region6: #{dnn_readout_combined_forward.1} parent=1 // loop_footer
      %s18 = sadd.s32 1, %s14
    $region7: #{dnn_readout_combined_forward.1} parent=1 // loop_footer_branch
      %13 = sbr.rel target = $region3
    $region8: #{dnn_readout_combined_forward.1} parent=1 // loop_exit
      _
    %1215 = vsyncpa [#allocation3], 1
    %s1216 = scalar_lea.sflag [#allocation3], 1
    %1217 = vsyncpa %s1216, 1

</llo_original>
